<compile_context>
chip_gen: v7x
topology: tpu7x:2x2x1
jax: 0.10.0
libtpu: 0.0.40
codegen_flags: <defaults>
</compile_context>

<pallas_src>
import jax
import jax.numpy as jnp
from jax import lax
from jax.experimental import pallas as pl
from jax.experimental.pallas import tpu as pltpu

QUINT8_MIN, QUINT8_MAX = 0.0, 255.0     # activation_dtype = torch.quint8
QINT8_MIN, QINT8_MAX = -128.0, 127.0    # weight_dtype     = torch.qint8
BN_EPS = 1e-5


# ----------------------------- quantization helpers (glue) -----------------------------
def assym_scale_offset(data, q_min, q_max):
    """get_tensor_assym_scale_offset (with a guard against constant tensors)."""
    d_min = jnp.min(data)
    d_max = jnp.max(data)
    scale = jnp.maximum((d_max - d_min) / (q_max - q_min), jnp.float32(1e-8))
    offset = q_min - d_min / scale
    return scale, jnp.clip(jnp.round(offset), q_min, q_max)   # integer zero point


def quantize_stored(x, scale, zp):
    """quint8 quantization, stored as int8 (code - 128) for cheap HBM traffic."""
    code = jnp.clip(jnp.round(x / scale + zp), QUINT8_MIN, QUINT8_MAX)
    return (code - 128.0).astype(jnp.int8)


def dequantize_stored(xs, scale, zp):
    return (xs.astype(jnp.float32) + (128.0 - zp)) * scale


def fake_quant_weight(w):
    """quantize_per_tensor(w, scale, offset, qint8) as seen numerically by qF.conv2d."""
    scale, zp = assym_scale_offset(w, QINT8_MIN, QINT8_MAX)
    wq = jnp.clip(jnp.round(w / scale + zp), QINT8_MIN, QINT8_MAX)
    return (wq - zp) * scale


# ----------------------------------- Pallas kernels ------------------------------------
def make_qconv_kernel(H, KH, WCout):
    """Banded implicit-GEMM quantized conv: KH lane-dense bf16 matmuls, f32 accumulation.

    scal_ref (SMEM f32[2]): clamp lo/hi in the stored-int8 code domain
    x_ref   : [1, Hp, Wp*Cin]      int8 stored codes (zero-point padded, row-flattened)
    w_ref   : [KH, Wp*Cin, W*Cout] bf16 block-banded folded weight
    beta_ref: [1, W*Cout]          f32 folded per-lane affine (bias, zps, out scale)
    o_ref   : [1, H, W*Cout]       int8 stored output codes (lane-dense)
    """

    def kernel(scal_ref, x_ref, w_ref, beta_ref, o_ref):
        lo = scal_ref[0]
        hi = scal_ref[1]
        xbf = x_ref[0].astype(jnp.bfloat16)                    # single cast pass
        acc = jnp.dot(xbf[0:H, :], w_ref[0], preferred_element_type=jnp.float32)
        for kh in range(1, KH):                                # static unroll over rows
            acc = acc + jnp.dot(xbf[kh:kh + H, :], w_ref[kh],
                                preferred_element_type=jnp.float32)
        acc = acc + beta_ref[...]                              # single per-lane affine
        o_ref[0] = jnp.clip(jnp.round(acc), lo, hi).astype(jnp.int8)

    return kernel


def _add_relu_kernel(scal_ref, c_ref, f_ref, o_ref):
    """torch.ops.quantized.add_relu on a tile-aligned int8 stored-code view.

    scal_ref (SMEM f32[6]): c_scale, c_off, f_scale, f_off, 1/out_scale, out_zp-128
    where *_off = (128 - zp) * scale  (dequant of stored codes is code*scale + off).
    """
    c = c_ref[...].astype(jnp.float32) * scal_ref[0] + scal_ref[1]
    f = f_ref[...].astype(jnp.float32) * scal_ref[2] + scal_ref[3]
    y = jnp.maximum(c + f, 0.0)
    q = jnp.round(y * scal_ref[4] + scal_ref[5])
    o_ref[...] = jnp.clip(q, -128.0, 127.0).astype(jnp.int8)


# ------------------------------ folding / padding helpers ------------------------------
def _fold_conv_params(w_deq_hwio, bias, x_scale, x_zp, out_scale, out_zp, relu):
    """Fold input dequant + requant scale + zero points + bias into (w_fold, beta, lo, hi).

    conv code (stored) = clip(round(dot(stored_in, w_fold) + beta), lo, hi) with
      w_fold = w_deq * x_scale / out_scale                              (bf16)
      beta   = (bias + (128 - x_zp)*x_scale*sum_taps(w_deq))/out_scale + out_zp - 128
    """
    inv_s = 1.0 / out_scale
    w_fold = (w_deq_hwio * (x_scale * inv_s)).astype(jnp.bfloat16)      # [KH,KW,Cin,Cout]
    sum_w = jnp.sum(w_deq_hwio, axis=(0, 1, 2))                         # [Cout]
    beta = (bias + (128.0 - x_zp) * x_scale * sum_w) * inv_s + out_zp - 128.0
    if relu:   # relu on a q-tensor clamps at its zero point
        lo = jnp.maximum(jnp.float32(QUINT8_MIN), out_zp) - 128.0
    else:
        lo = jnp.float32(QUINT8_MIN - 128.0)
    hi = jnp.float32(QUINT8_MAX - 128.0)
    return w_fold, beta, lo, hi


def _pad_stored(x_stored, x_zp, pad):
    """Spatial padding in the quantized stored-int8 domain (pad value dequantizes to 0)."""
    pad_code = (jnp.clip(jnp.round(x_zp), QUINT8_MIN, QUINT8_MAX) - 128.0).astype(jnp.int8)
    return jnp.pad(x_stored, ((0, 0), (pad, pad), (pad, pad), (0, 0)),
                   constant_values=pad_code)


def _band_weight(w_fold_bf16, W, Wp):
    """Block-banded weight: band[kh, (w+kw)*Cin+ci, w*Cout+co] = w_fold[kh, kw, ci, co]."""
    KH, KW, Cin, Cout = w_fold_bf16.shape
    shift = jnp.stack([jnp.eye(Wp, W, k=-kw, dtype=jnp.float32) for kw in range(KW)])
    band = jnp.einsum('kpw,hkio->hpiwo', shift, w_fold_bf16.astype(jnp.float32))
    return band.reshape(KH, Wp * Cin, W * Cout).astype(jnp.bfloat16)


# ----------------------------------- Pallas wrappers ------------------------------------
def qconv2d_pallas(x_stored, x_scale, x_zp, w_deq_hwio, bias,
                   out_scale, out_zp, relu=False, pad=1):
    N, H, W, Cin = x_stored.shape
    KH, KW, _, Cout = w_deq_hwio.shape
    Hp, Wp = H + 2 * pad, W + 2 * pad
    WCout = W * Cout

    w_fold, beta, lo, hi = _fold_conv_params(w_deq_hwio, bias, x_scale, x_zp,
                                             out_scale, out_zp, relu)
    band = _band_weight(w_fold, W, Wp)                                  # [KH, Wp*Cin, W*Cout]
    beta_t = jnp.tile(beta, W).reshape(1, WCout).astype(jnp.float32)    # per output lane
    xp = _pad_stored(x_stored, x_zp, pad).reshape(N, Hp, Wp * Cin)
    scalars = jnp.stack([lo, hi]).astype(jnp.float32)

    kernel = make_qconv_kernel(H, KH, WCout)
    out = pl.pallas_call(
        kernel,
        out_shape=jax.ShapeDtypeStruct((N, H, WCout), jnp.int8),
        grid=(N,),
        in_specs=[
            pl.BlockSpec(memory_space=pltpu.MemorySpace.SMEM),               # clamp bounds
            pl.BlockSpec((1, Hp, Wp * Cin), lambda n: (n, 0, 0)),            # padded int8 rows
            pl.BlockSpec((KH, Wp * Cin, WCout), lambda n: (0, 0, 0)),        # banded bf16 weight
            pl.BlockSpec((1, WCout), lambda n: (0, 0)),                      # folded affine
        ],
        out_specs=pl.BlockSpec((1, H, WCout), lambda n: (n, 0, 0)),
        compiler_params=pltpu.CompilerParams(dimension_semantics=("parallel",)),
    )(scalars, xp, band, beta_t)
    return out.reshape(N, H, W, Cout)


def add_relu_pallas(c_stored, c_scale, c_zp, f_stored, f_scale, f_zp, out_scale, out_zp):
    shape = c_stored.shape
    total = c_stored.size
    if total % 128 == 0:                           # tile-aligned lane-dense view
        rows, cols = total // 128, 128
    else:
        rows, cols = shape[0], total // shape[0]
    c2 = c_stored.reshape(rows, cols)
    f2 = f_stored.reshape(rows, cols)
    scalars = jnp.stack([c_scale, (128.0 - c_zp) * c_scale,
                         f_scale, (128.0 - f_zp) * f_scale,
                         1.0 / out_scale, out_zp - 128.0]).astype(jnp.float32)
    out = pl.pallas_call(
        _add_relu_kernel,
        out_shape=jax.ShapeDtypeStruct((rows, cols), jnp.int8),
        grid=(1,),
        in_specs=[
            pl.BlockSpec(memory_space=pltpu.MemorySpace.SMEM),
            pl.BlockSpec((rows, cols), lambda i: (0, 0)),
            pl.BlockSpec((rows, cols), lambda i: (0, 0)),
        ],
        out_specs=pl.BlockSpec((rows, cols), lambda i: (0, 0)),
    )(scalars, c2, f2)
    return out.reshape(shape)


# --------------------------- plain-JAX references (debug only) --------------------------
def qconv2d_ref(x_stored, x_scale, x_zp, w_deq_hwio, bias, out_scale, out_zp,
                relu=False, pad=1):
    N, H, W, Cin = x_stored.shape
    KH, KW, _, Cout = w_deq_hwio.shape
    w_fold, beta, lo, hi = _fold_conv_params(w_deq_hwio, bias, x_scale, x_zp,
                                             out_scale, out_zp, relu)
    xp = _pad_stored(x_stored, x_zp, pad).astype(jnp.float32)
    cols = []
    for kh in range(KH):
        for kw in range(KW):
            cols.append(xp[:, kh:kh + H, kw:kw + W, :])
    p = jnp.stack(cols, axis=3).reshape(N, H * W, KH * KW * Cin)
    wm = w_fold.astype(jnp.float32).reshape(KH * KW * Cin, Cout)
    acc = jnp.einsum('npk,kc->npc', p, wm) + beta[None, None, :]
    return jnp.clip(jnp.round(acc), lo, hi).astype(jnp.int8).reshape(N, H, W, Cout)


def add_relu_ref(c_stored, c_scale, c_zp, f_stored, f_scale, f_zp, out_scale, out_zp):
    c = c_stored.astype(jnp.float32) * c_scale + (128.0 - c_zp) * c_scale
    f = f_stored.astype(jnp.float32) * f_scale + (128.0 - f_zp) * f_scale
    y = jnp.maximum(c + f, 0.0)
    q = jnp.round(y * (1.0 / out_scale) + (out_zp - 128.0))
    return jnp.clip(q, -128.0, 127.0).astype(jnp.int8)


# --------------------------- float reference / parameter glue ---------------------------
def fuse_conv_bn(w_oihw, gamma, beta, mean, var, eps=BN_EPS):
    inv_std = 1.0 / jnp.sqrt(var + eps)
    w = gamma[:, None, None, None] * w_oihw * inv_std[:, None, None, None]
    b = beta - gamma * mean * inv_std
    return w, b


def oihw_to_hwio(w):
    return jnp.transpose(w, (2, 3, 1, 0))


def conv_bn_float(x_nhwc, w_oihw, bias):
    y = lax.conv_general_dilated(x_nhwc, oihw_to_hwio(w_oihw), (1, 1), 'SAME',
                                 dimension_numbers=('NHWC', 'HWIO', 'NHWC'))
    return y + bias[None, None, None, :]


def make_skip_connection_params(key, C, K=3):
    def conv_bn_params(k):
        kw, kg, kb, km, kv = jax.random.split(k, 5)
        return dict(
            w=0.3 * jax.random.normal(kw, (C, C, K, K), jnp.float32),   # OIHW like torch
            gamma=1.0 + 0.1 * jax.random.normal(kg, (C,), jnp.float32),
            beta=0.1 * jax.random.normal(kb, (C,), jnp.float32),
            mean=0.1 * jax.random.normal(km, (C,), jnp.float32),
            var=0.5 + jnp.abs(jax.random.normal(kv, (C,), jnp.float32)),
        )
    k1, k2 = jax.random.split(key)
    return conv_bn_params(k1), conv_bn_params(k2)


# --------------------------------- QSkipConnection.forward ------------------------------
def qskip_connection_forward(x_nchw, params):
    """First (un-compile()d) call of QSkipConnection: min/max calibration in plain JAX,
    quantized compute in Pallas.  Returns (quint8 codes uint8 NHWC, scale, zero_point, aux).
    No host-synchronizing checks in here (see __main__)."""
    x = jnp.transpose(x_nchw, (0, 2, 3, 1))                    # NCHW -> NHWC

    p1, p2 = params
    w1f, b1 = fuse_conv_bn(p1['w'], p1['gamma'], p1['beta'], p1['mean'], p1['var'])
    w2f, b2 = fuse_conv_bn(p2['w'], p2['gamma'], p2['beta'], p2['mean'], p2['var'])
    w1q = fake_quant_weight(w1f)                               # QConvBatchReLU2d.w (deq)
    w2q = fake_quant_weight(w2f)                               # QConvBatch2d.w     (deq)

    # QInput-style quantization of the incoming activation
    x_scale, x_zp = assym_scale_offset(x, QUINT8_MIN, QUINT8_MAX)
    xs = quantize_stored(x, x_scale, x_zp)
    x_deq = dequantize_stored(xs, x_scale, x_zp)

    # ---- f[0] = QConvBatchReLU2d: calibration is BN(Conv(X.deq)) pre-ReLU ----
    a1_cal = conv_bn_float(x_deq, w1f, b1)
    s1, z1 = assym_scale_offset(a1_cal, QUINT8_MIN, QUINT8_MAX)
    a1s = qconv2d_pallas(xs, x_scale, x_zp, oihw_to_hwio(w1q), b1, s1, z1, relu=True)

    # ---- f[1] = QConvBatch2d ----
    a2_cal = conv_bn_float(dequantize_stored(a1s, s1, z1), w2f, b2)
    s2, z2 = assym_scale_offset(a2_cal, QUINT8_MIN, QUINT8_MAX)
    a2s = qconv2d_pallas(a1s, s1, z1, oihw_to_hwio(w2q), b2, s2, z2, relu=False)

    # ---- skip-block calibration: relu(c_o(X.deq) + f_o(X.deq)) with ORIGINAL float branch
    # (reuses a1_cal = BN(Conv(X.deq)) instead of recomputing the first float conv)
    f_o = conv_bn_float(jax.nn.relu(a1_cal), w2f, b2)
    out_cal = jax.nn.relu(x_deq + f_o)                         # c_o = Identity
    so, zo = assym_scale_offset(out_cal, QUINT8_MIN, QUINT8_MAX)

    # ---- torch.ops.quantized.add_relu(c(X), f(X), scale, zero_point); c(X)=X ----
    outs = add_relu_pallas(xs, x_scale, x_zp, a2s, s2, z2, so, zo)
    out_codes = (outs.astype(jnp.int32) + 128).astype(jnp.uint8)

    aux = dict(xs=xs, x_scale=x_scale, x_zp=x_zp, a1s=a1s, s1=s1, z1=z1,
               a2s=a2s, s2=s2, z2=z2, w1q=w1q, w2q=w2q, b1=b1, b2=b2, out_stored=outs)
    return out_codes, so, zo, aux


def _code_diff(a, b):
    return int(jnp.max(jnp.abs(a.astype(jnp.int32) - b.astype(jnp.int32))))


if __name__ == "__main__":
    key = jax.random.PRNGKey(0)
    kx, kp = jax.random.split(key)
    N, C, H, W = 2, 8, 16, 16
    x = jax.random.normal(kx, (N, C, H, W), dtype=jnp.float32)     # NCHW like PyTorch
    params = make_skip_connection_params(kp, C)

    fwd = jax.jit(qskip_connection_forward)
    out_codes, out_scale, out_zp, aux = fwd(x, params)
    jax.block_until_ready(out_codes)

    # Correctness checks (host sync allowed here; deliberately NOT in the forward path).
    a1_ref = qconv2d_ref(aux['xs'], aux['x_scale'], aux['x_zp'],
                         oihw_to_hwio(aux['w1q']), aux['b1'], aux['s1'], aux['z1'],
                         relu=True)
    a2_ref = qconv2d_ref(aux['a1s'], aux['s1'], aux['z1'],
                         oihw_to_hwio(aux['w2q']), aux['b2'], aux['s2'], aux['z2'],
                         relu=False)
    out_ref = add_relu_ref(aux['xs'], aux['x_scale'], aux['x_zp'],
                           aux['a2s'], aux['s2'], aux['z2'], out_scale, out_zp)
    assert _code_diff(aux['a1s'], a1_ref) <= 1
    assert _code_diff(aux['a2s'], a2_ref) <= 1
    assert _code_diff(aux['out_stored'], out_ref) <= 1
    assert out_codes.shape == (N, H, W, C) and out_codes.dtype == jnp.uint8
    print("KERNEL_OK")
</pallas_src>

<mosaic_0001>
module attributes {stable_mosaic.version = 11 : i64} {
  func.func @kernel(%arg0: i32, %arg1: memref<2xf32, #tpu.memory_space<smem>>, %arg2: memref<1x18x144xi8, #tpu.memory_space<vmem>>, %arg3: memref<3x144x128xbf16, #tpu.memory_space<vmem>>, %arg4: memref<1x128xf32, #tpu.memory_space<vmem>>, %arg5: memref<1x16x128xi8, #tpu.memory_space<vmem>>) attributes {dimension_semantics = [#tpu.dimension_semantics<parallel>], iteration_bounds = array<i64: 2>, scalar_prefetch = 0 : i64, scratch_operands = 0 : i64, tpu.core_type = #tpu.core_type<tc>, window_params = [{transform_indices = @transform_0, window_bounds = array<i64: 2>}, {transform_indices = @transform_1, window_bounds = array<i64: 1, 18, 144>}, {pipeline_mode = #tpu.pipeline_mode<synchronous>, transform_indices = @transform_2, window_bounds = array<i64: 3, 144, 128>}, {pipeline_mode = #tpu.pipeline_mode<synchronous>, transform_indices = @transform_3, window_bounds = array<i64: 1, 128>}, {transform_indices = @transform_4, window_bounds = array<i64: 1, 16, 128>}]} {
    %c0 = arith.constant 0 : index
    %0 = memref.load %arg1[%c0] : memref<2xf32, #tpu.memory_space<smem>>
    %c1 = arith.constant 1 : index
    %1 = memref.load %arg1[%c1] : memref<2xf32, #tpu.memory_space<smem>>
    %c0_0 = arith.constant 0 : index
    %c0_1 = arith.constant 0 : index
    %c0_2 = arith.constant 0 : index
    %2 = vector.load %arg2[%c0_0, %c0_1, %c0_2] : memref<1x18x144xi8, #tpu.memory_space<vmem>>, vector<1x18x144xi8>
    %3 = vector.shape_cast %2 : vector<1x18x144xi8> to vector<18x144xi8>
    %4 = arith.sitofp %3 : vector<18x144xi8> to vector<18x144xbf16>
    %5 = vector.extract_strided_slice %4 {offsets = [0, 0], sizes = [16, 144], strides = [1, 1]} : vector<18x144xbf16> to vector<16x144xbf16>
    %c0_3 = arith.constant 0 : index
    %c0_4 = arith.constant 0 : index
    %c0_5 = arith.constant 0 : index
    %6 = vector.load %arg3[%c0_3, %c0_4, %c0_5] : memref<3x144x128xbf16, #tpu.memory_space<vmem>>, vector<1x144x128xbf16>
    %7 = vector.shape_cast %6 : vector<1x144x128xbf16> to vector<144x128xbf16>
    %cst = arith.constant dense<0.000000e+00> : vector<16x128xf32>
    %8 = tpu.matmul %5, %7, %cst {dimension_numbers = #tpu.dot_dimension_numbers<[1], [0], [0], [1], [0, 0, 1, 1], [], []>} : vector<16x144xbf16>, vector<144x128xbf16>, vector<16x128xf32> -> vector<16x128xf32>
    %9 = vector.extract_strided_slice %4 {offsets = [1, 0], sizes = [16, 144], strides = [1, 1]} : vector<18x144xbf16> to vector<16x144xbf16>
    %c1_6 = arith.constant 1 : index
    %c0_7 = arith.constant 0 : index
    %c0_8 = arith.constant 0 : index
    %10 = vector.load %arg3[%c1_6, %c0_7, %c0_8] : memref<3x144x128xbf16, #tpu.memory_space<vmem>>, vector<1x144x128xbf16>
    %11 = vector.shape_cast %10 : vector<1x144x128xbf16> to vector<144x128xbf16>
    %cst_9 = arith.constant dense<0.000000e+00> : vector<16x128xf32>
    %12 = tpu.matmul %9, %11, %cst_9 {dimension_numbers = #tpu.dot_dimension_numbers<[1], [0], [0], [1], [0, 0, 1, 1], [], []>} : vector<16x144xbf16>, vector<144x128xbf16>, vector<16x128xf32> -> vector<16x128xf32>
    %13 = arith.addf %8, %12 : vector<16x128xf32>
    %14 = vector.extract_strided_slice %4 {offsets = [2, 0], sizes = [16, 144], strides = [1, 1]} : vector<18x144xbf16> to vector<16x144xbf16>
    %c2 = arith.constant 2 : index
    %c0_10 = arith.constant 0 : index
    %c0_11 = arith.constant 0 : index
    %15 = vector.load %arg3[%c2, %c0_10, %c0_11] : memref<3x144x128xbf16, #tpu.memory_space<vmem>>, vector<1x144x128xbf16>
    %16 = vector.shape_cast %15 : vector<1x144x128xbf16> to vector<144x128xbf16>
    %cst_12 = arith.constant dense<0.000000e+00> : vector<16x128xf32>
    %17 = tpu.matmul %14, %16, %cst_12 {dimension_numbers = #tpu.dot_dimension_numbers<[1], [0], [0], [1], [0, 0, 1, 1], [], []>} : vector<16x144xbf16>, vector<144x128xbf16>, vector<16x128xf32> -> vector<16x128xf32>
    %18 = arith.addf %13, %17 : vector<16x128xf32>
    %c0_13 = arith.constant 0 : index
    %c0_14 = arith.constant 0 : index
    %19 = vector.load %arg4[%c0_13, %c0_14] : memref<1x128xf32, #tpu.memory_space<vmem>>, vector<1x128xf32>
    %20 = vector.broadcast %19 : vector<1x128xf32> to vector<16x128xf32>
    %21 = arith.addf %18, %20 : vector<16x128xf32>
    %22 = math.roundeven %21 : vector<16x128xf32>
    %23 = vector.broadcast %0 : f32 to vector<16x128xf32>
    %24 = arith.maximumf %23, %22 : vector<16x128xf32>
    %25 = vector.broadcast %1 : f32 to vector<16x128xf32>
    %26 = arith.minimumf %25, %24 : vector<16x128xf32>
    %27 = arith.fptosi %26 : vector<16x128xf32> to vector<16x128xi8>
    %c0_15 = arith.constant 0 : index
    %c0_16 = arith.constant 0 : index
    %c0_17 = arith.constant 0 : index
    %28 = vector.load %arg5[%c0_15, %c0_16, %c0_17] : memref<1x16x128xi8, #tpu.memory_space<vmem>>, vector<1x16x128xi8>
    %29 = vector.shape_cast %28 : vector<1x16x128xi8> to vector<16x128xi8>
    %30 = vector.shape_cast %27 : vector<16x128xi8> to vector<1x16x128xi8>
    tpu.vector_store %arg5[%c0_15, %c0_16, %c0_17], %30 {strides = array<i32>} : memref<1x16x128xi8, #tpu.memory_space<vmem>>, vector<1x16x128xi8>,
    return
  }
  func.func @transform_0(%arg0: i32) -> i32 {
    %c0_i32 = arith.constant 0 : i32
    %c0_i32_0 = arith.constant 0 : i32
    return %c0_i32 : i32
  }
  func.func @transform_1(%arg0: i32) -> (i32, i32, i32) {
    %c0_i32 = arith.constant 0 : i32
    %c0_i32_0 = arith.constant 0 : i32
    %c0_i32_1 = arith.constant 0 : i32
    return %arg0, %c0_i32, %c0_i32_0 : i32, i32, i32
  }
  func.func @transform_2(%arg0: i32) -> (i32, i32, i32) {
    %c0_i32 = arith.constant 0 : i32
    %c0_i32_0 = arith.constant 0 : i32
    %c0_i32_1 = arith.constant 0 : i32
    %c0_i32_2 = arith.constant 0 : i32
    return %c0_i32, %c0_i32_0, %c0_i32_1 : i32, i32, i32
  }
  func.func @transform_3(%arg0: i32) -> (i32, i32) {
    %c0_i32 = arith.constant 0 : i32
    %c0_i32_0 = arith.constant 0 : i32
    %c0_i32_1 = arith.constant 0 : i32
    return %c0_i32, %c0_i32_0 : i32, i32
  }
  func.func @transform_4(%arg0: i32) -> (i32, i32, i32) {
    %c0_i32 = arith.constant 0 : i32
    %c0_i32_0 = arith.constant 0 : i32
    %c0_i32_1 = arith.constant 0 : i32
    return %arg0, %c0_i32, %c0_i32_0 : i32, i32, i32
  }
}

module attributes {stable_mosaic.version = 11 : i64} {
  func.func @_add_relu_kernel(%arg0: i32, %arg1: memref<6xf32, #tpu.memory_space<smem>>, %arg2: memref<32x128xi8, #tpu.memory_space<vmem>>, %arg3: memref<32x128xi8, #tpu.memory_space<vmem>>, %arg4: memref<32x128xi8, #tpu.memory_space<vmem>>) attributes {dimension_semantics = [#tpu.dimension_semantics<arbitrary>], iteration_bounds = array<i64: 1>, scalar_prefetch = 0 : i64, scratch_operands = 0 : i64, tpu.core_type = #tpu.core_type<tc>, window_params = [{transform_indices = @transform_0, window_bounds = array<i64: 6>}, {pipeline_mode = #tpu.pipeline_mode<synchronous>, transform_indices = @transform_1, window_bounds = array<i64: 32, 128>}, {pipeline_mode = #tpu.pipeline_mode<synchronous>, transform_indices = @transform_2, window_bounds = array<i64: 32, 128>}, {pipeline_mode = #tpu.pipeline_mode<synchronous>, transform_indices = @transform_3, window_bounds = array<i64: 32, 128>}]} {
    %c0 = arith.constant 0 : index
    %c0_0 = arith.constant 0 : index
    %0 = vector.load %arg2[%c0, %c0_0] : memref<32x128xi8, #tpu.memory_space<vmem>>, vector<32x128xi8>
    %1 = arith.sitofp %0 : vector<32x128xi8> to vector<32x128xf32>
    %c0_1 = arith.constant 0 : index
    %2 = memref.load %arg1[%c0_1] : memref<6xf32, #tpu.memory_space<smem>>
    %3 = vector.broadcast %2 : f32 to vector<32x128xf32>
    %4 = arith.mulf %1, %3 : vector<32x128xf32>
    %c1 = arith.constant 1 : index
    %5 = memref.load %arg1[%c1] : memref<6xf32, #tpu.memory_space<smem>>
    %6 = vector.broadcast %5 : f32 to vector<32x128xf32>
    %7 = arith.addf %4, %6 : vector<32x128xf32>
    %c0_2 = arith.constant 0 : index
    %c0_3 = arith.constant 0 : index
    %8 = vector.load %arg3[%c0_2, %c0_3] : memref<32x128xi8, #tpu.memory_space<vmem>>, vector<32x128xi8>
    %9 = arith.sitofp %8 : vector<32x128xi8> to vector<32x128xf32>
    %c2 = arith.constant 2 : index
    %10 = memref.load %arg1[%c2] : memref<6xf32, #tpu.memory_space<smem>>
    %11 = vector.broadcast %10 : f32 to vector<32x128xf32>
    %12 = arith.mulf %9, %11 : vector<32x128xf32>
    %c3 = arith.constant 3 : index
    %13 = memref.load %arg1[%c3] : memref<6xf32, #tpu.memory_space<smem>>
    %14 = vector.broadcast %13 : f32 to vector<32x128xf32>
    %15 = arith.addf %12, %14 : vector<32x128xf32>
    %16 = arith.addf %7, %15 : vector<32x128xf32>
    %cst = arith.constant 0.000000e+00 : f32
    %17 = vector.broadcast %cst : f32 to vector<32x128xf32>
    %18 = arith.maximumf %16, %17 : vector<32x128xf32>
    %c4 = arith.constant 4 : index
    %19 = memref.load %arg1[%c4] : memref<6xf32, #tpu.memory_space<smem>>
    %20 = vector.broadcast %19 : f32 to vector<32x128xf32>
    %21 = arith.mulf %18, %20 : vector<32x128xf32>
    %c5 = arith.constant 5 : index
    %22 = memref.load %arg1[%c5] : memref<6xf32, #tpu.memory_space<smem>>
    %23 = vector.broadcast %22 : f32 to vector<32x128xf32>
    %24 = arith.addf %21, %23 : vector<32x128xf32>
    %25 = math.roundeven %24 : vector<32x128xf32>
    %cst_4 = arith.constant -1.280000e+02 : f32
    %cst_5 = arith.constant 1.270000e+02 : f32
    %26 = vector.broadcast %cst_4 : f32 to vector<32x128xf32>
    %27 = arith.maximumf %26, %25 : vector<32x128xf32>
    %28 = vector.broadcast %cst_5 : f32 to vector<32x128xf32>
    %29 = arith.minimumf %28, %27 : vector<32x128xf32>
    %30 = arith.fptosi %29 : vector<32x128xf32> to vector<32x128xi8>
    %c0_6 = arith.constant 0 : index
    %c0_7 = arith.constant 0 : index
    %31 = vector.load %arg4[%c0_6, %c0_7] : memref<32x128xi8, #tpu.memory_space<vmem>>, vector<32x128xi8>
    tpu.vector_store %arg4[%c0_6, %c0_7], %30 {strides = array<i32>} : memref<32x128xi8, #tpu.memory_space<vmem>>, vector<32x128xi8>,
    return
  }
  func.func @transform_0(%arg0: i32) -> i32 {
    %c0_i32 = arith.constant 0 : i32
    %c0_i32_0 = arith.constant 0 : i32
    return %c0_i32 : i32
  }
  func.func @transform_1(%arg0: i32) -> (i32, i32) {
    %c0_i32 = arith.constant 0 : i32
    %c0_i32_0 = arith.constant 0 : i32
    %c0_i32_1 = arith.constant 0 : i32
    return %c0_i32, %c0_i32_0 : i32, i32
  }
  func.func @transform_2(%arg0: i32) -> (i32, i32) {
    %c0_i32 = arith.constant 0 : i32
    %c0_i32_0 = arith.constant 0 : i32
    %c0_i32_1 = arith.constant 0 : i32
    return %c0_i32, %c0_i32_0 : i32, i32
  }
  func.func @transform_3(%arg0: i32) -> (i32, i32) {
    %c0_i32 = arith.constant 0 : i32
    %c0_i32_0 = arith.constant 0 : i32
    %c0_i32_1 = arith.constant 0 : i32
    return %c0_i32, %c0_i32_0 : i32, i32
  }
}

</mosaic_0001>

<llo_original>
// kernel: tile.13
$region0: #{tile.13}
  #allocation0 [shape = 's32[1]{0}', space=sflag, size = 0x4, scoped, tag = 'scoped memory for tile.13']
  %s0 = inlined_call_operand.vmem [shape: f32[8], index: 0, kind: input, shape index: {}]
  %s1 = inlined_call_operand.vmem [shape: f32[16,8], index: 1, kind: output, shape index: {}]
  // Predicated region
  $region2: #{tile.13} parent=0 // pred_check
    _
  $region3: #{tile.13} parent=0 // pred_check_branch
    %3 = sbr.rel (0) target = $region5
  $region4: #{tile.13} parent=0 // pred_region
    _
  $region5: #{tile.13} parent=0 // pred_fallthru
    _
  %v4 = vld [vmem:[%s0] ss:$0 sm:$0xff]
  %5 = vst [vmem:[%s1] sm:$0xff] %v4
  %s6 = scalar_lea.vmem %s1, 8
  %7 = vst [vmem:[%s6] sm:$0xff] %v4

// kernel: tile.14
$region0: #{tile.14}
  %s0 = inlined_call_operand.vmem [shape: f32[16,8], index: 0, kind: input, shape index: {}]
  %s1 = inlined_call_operand.vmem [shape: f32[1,128], index: 1, kind: output, shape index: {}]
  $region1: #{tile.14} parent=0
    #allocation0 [shape = 'u8[4096]{0}', space=vmem, size = 0x1000, scoped, tag = 'scoped mem for output reshape']
    %v2 = vld [vmem:[%s0] sm:$0x1]
    %vm3 = vcmask 64512
    %4 = vst.msk [vmem:[#allocation0] sm:$0x1] %vm3, %v2
    %s5 = scalar_lea.vmem %s0, 15
    %v6 = vld [vmem:[%s5] sm:$0x1]
    %7 = vrot.lane.b32.xlu0 %v6, 120
    %v8 = vpop.permute.xlu0 %7
    %vm9 = vcmask 1048512
    %10 = vst.msk [vmem:[#allocation0] sm:$0x1] %vm9, %v8
    %s11 = scalar_lea.vmem %s0, 14
    %v12 = vld [vmem:[%s11] sm:$0x1]
    %13 = vrot.lane.b32.xlu0 %v12, 112
    %v14 = vpop.permute.xlu0 %13
    %vm15 = vcmask 982912
    %16 = vst.msk [vmem:[#allocation0] sm:$0x1] %vm15, %v14
    %s17 = scalar_lea.vmem %s0, 13
    %v18 = vld [vmem:[%s17] sm:$0x1]
    %19 = vrot.lane.b32.xlu0 %v18, 104
    %v20 = vpop.permute.xlu0 %19
    %vm21 = vcmask 917312
    %22 = vst.msk [vmem:[#allocation0] sm:$0x1] %vm21, %v20
    %s23 = scalar_lea.vmem %s0, 12
    %v24 = vld [vmem:[%s23] sm:$0x1]
    %25 = vrot.lane.b32.xlu0 %v24, 96
    %v26 = vpop.permute.xlu0 %25
    %vm27 = vcmask 851712
    %28 = vst.msk [vmem:[#allocation0] sm:$0x1] %vm27, %v26
    %s29 = scalar_lea.vmem %s0, 11
    %v30 = vld [vmem:[%s29] sm:$0x1]
    %31 = vrot.lane.b32.xlu0 %v30, 88
    %v32 = vpop.permute.xlu0 %31
    %vm33 = vcmask 786112
    %34 = vst.msk [vmem:[#allocation0] sm:$0x1] %vm33, %v32
    %s35 = scalar_lea.vmem %s0, 10
    %v36 = vld [vmem:[%s35] sm:$0x1]
    %37 = vrot.lane.b32.xlu0 %v36, 80
    %v38 = vpop.permute.xlu0 %37
    %vm39 = vcmask 720512
    %40 = vst.msk [vmem:[#allocation0] sm:$0x1] %vm39, %v38
    %s41 = scalar_lea.vmem %s0, 9
    %v42 = vld [vmem:[%s41] sm:$0x1]
    %43 = vrot.lane.b32.xlu0 %v42, 72
    %v44 = vpop.permute.xlu0 %43
    %vm45 = vcmask 654912
    %46 = vst.msk [vmem:[#allocation0] sm:$0x1] %vm45, %v44
    %s47 = scalar_lea.vmem %s0, 8
    %v48 = vld [vmem:[%s47] sm:$0x1]
    %49 = vrot.lane.b32.xlu0 %v48, 64
    %v50 = vpop.permute.xlu0 %49
    %vm51 = vcmask 589312
    %52 = vst.msk [vmem:[#allocation0] sm:$0x1] %vm51, %v50
    %s53 = scalar_lea.vmem %s0, 7
    %v54 = vld [vmem:[%s53] sm:$0x1]
    %55 = vrot.lane.b32.xlu0 %v54, 56
    %v56 = vpop.permute.xlu0 %55
    %vm57 = vcmask 523712
    %58 = vst.msk [vmem:[#allocation0] sm:$0x1] %vm57, %v56
    %s59 = scalar_lea.vmem %s0, 6
    %v60 = vld [vmem:[%s59] sm:$0x1]
    %61 = vrot.lane.b32.xlu0 %v60, 48
    %v62 = vpop.permute.xlu0 %61
    %vm63 = vcmask 458112
    %64 = vst.msk [vmem:[#allocation0] sm:$0x1] %vm63, %v62
    %s65 = scalar_lea.vmem %s0, 5
    %v66 = vld [vmem:[%s65] sm:$0x1]
    %67 = vrot.lane.b32.xlu0 %v66, 40
    %v68 = vpop.permute.xlu0 %67
    %vm69 = vcmask 392512
    %70 = vst.msk [vmem:[#allocation0] sm:$0x1] %vm69, %v68
    %s71 = scalar_lea.vmem %s0, 4
    %v72 = vld [vmem:[%s71] sm:$0x1]
    %73 = vrot.lane.b32.xlu0 %v72, 32
    %v74 = vpop.permute.xlu0 %73
    %vm75 = vcmask 326912
    %76 = vst.msk [vmem:[#allocation0] sm:$0x1] %vm75, %v74
    %s77 = scalar_lea.vmem %s0, 3
    %v78 = vld [vmem:[%s77] sm:$0x1]
    %79 = vrot.lane.b32.xlu0 %v78, 24
    %v80 = vpop.permute.xlu0 %79
    %vm81 = vcmask 261312
    %82 = vst.msk [vmem:[#allocation0] sm:$0x1] %vm81, %v80
    %s83 = scalar_lea.vmem %s0, 2
    %v84 = vld [vmem:[%s83] sm:$0x1]
    %85 = vrot.lane.b32.xlu0 %v84, 16
    %v86 = vpop.permute.xlu0 %85
    %vm87 = vcmask 195712
    %88 = vst.msk [vmem:[#allocation0] sm:$0x1] %vm87, %v86
    %s89 = scalar_lea.vmem %s0, 1
    %v90 = vld [vmem:[%s89] sm:$0x1]
    %91 = vrot.lane.b32.xlu0 %v90, 8
    %v92 = vpop.permute.xlu0 %91
    %vm93 = vcmask 130112
    %94 = vst.msk [vmem:[#allocation0] sm:$0x1] %vm93, %v92
    %s96 = sshllo.u32 0, 1
    %v98 = vld [vmem:[#allocation0] sm:%s96]
    %s99 = sshllo.u32 0, 1
    %100 = vst [vmem:[%s1] sm:%s99] %v98

// kernel: qskip_connection_forward.3
$region0: #{qskip_connection_forward.3}
  #allocation0 [shape = 'u32[]', space=smem, size = 0x4, offset = 0x4, fixed_abs, tag = 'smem constant byte address 0x4 - core index']
  #allocation1 [shape = 'u32[144,128]{1,0:T(1,128)}', space=vmem, size = 0x12000, scoped, tag = 'internal scratch']
  %s0 = inlined_call_operand.vmem [shape: f32[2], index: 0, kind: input, shape index: {}]
  %s1 = inlined_call_operand.vmem [shape: s8[2,18,144], index: 1, kind: input, shape index: {}]
  %s2 = inlined_call_operand.vmem [shape: bf16[3,144,128], index: 2, kind: input, shape index: {}]
  %s3 = inlined_call_operand.vmem [shape: f32[1,128], index: 3, kind: input, shape index: {}]
  %s4 = inlined_call_operand.vmem [shape: s8[2,16,128], index: 4, kind: output, shape index: {}]
  %s5 = sld [smem:[#allocation0]]
  $region53: #{qskip_connection_forward.3} parent=0
    _
  %s7 = ssub.s32 1, %s5
  %s8 = scalar_select 0, %s7, %s5
  $region1: #{qskip_connection_forward.3} parent=0
    #allocation2 [shape = 'u8[512]{0}', space=smem, size = 0x200, scoped, tag = 'input window, operand 0, single buffered']
    #allocation3 [shape = 's32[2]{0}', space=sflag, size = 0x8, scoped, tag = 'scoped memory for qskip_connection_forward.3']
    %9 = vsyncpa [#allocation3], 0
    loop: start=0, step=1, limit=4
    $region2: #{qskip_connection_forward.3} parent=1 // loop_pre_header
      _
    $region3: #{qskip_connection_forward.3} parent=1 // loop_header
      %s11 = sphi 0, %s15
      %p12 = scmp.ge.s32.totalorder %s11, 4
      %s19 = sphi 0, %s19
      %s21 = sphi 0, %s19
      %s22 = sphi 0, %s21
      %s36 = sphi 0, %s22
      %s42 = sphi 0, %s44
      %s45 = sphi 0, %s42
      %s46 = sphi 0, %s45
      %s62 = sphi 0, %s46
      %s66 = sphi 0, %s66
      %s68 = sphi 0, %s66
      %s69 = sphi 0, %s68
      %s83 = sphi 0, %s69
      %s87 = sphi 0, %s87
      %s89 = sphi 0, %s87
      %s90 = sphi 0, %s89
      %s104 = sphi 0, %s90
      %s110 = sphi 0, %s112
      %s113 = sphi 0, %s110
      %s114 = sphi 0, %s113
      %s130 = sphi 0, %s114
    $region4: #{qskip_connection_forward.3} parent=1 // loop_header_branch
      %14 = sbr.rel (%p12) target = $region8
    $region5: #{qskip_connection_forward.3} parent=1 // loop_body
      %s16 = ssub.s32 %s11, 1
      %s17 = ssub.s32 %s11, 2
      %s18 = sadd.s32 %s11, 1
      %s20 = sadd.s32 %s19, 1
      %p23 = scmp.eq.s32.totalorder %s11, 1
      %p24 = scmp.ne.s32.totalorder %s19, %s21
      %p25 = scmp.eq.s32.totalorder %s11, 0
      %p26 = por %p24, %p25
      %p27 = scmp.ne.s32.totalorder %s19, %s21
      %p28 = scmp.eq.s32.totalorder %s16, 1
      %p29 = por %p27, %p28
      %p30 = scmp.ne.s32.totalorder %s21, %s22
      %p31 = scmp.eq.s32.totalorder %s16, 0
      %p32 = por %p30, %p31
      %p33 = scmp.ne.s32.totalorder %s21, %s22
      %p34 = scmp.eq.s32.totalorder %s17, 1
      %p35 = por %p33, %p34
      %p37 = scmp.ne.s32.totalorder %s22, %s36
      %p38 = scmp.eq.s32.totalorder %s17, 0
      %p39 = por %p37, %p38
      %s40 = ssub.s32 %s11, %s18
      %p41 = scmp.eq.s32.totalorder %s40, 0
      %s43 = sadd.s32 %s42, 1
      %s44 = scalar_select %p41, %s42, %s43
      %p47 = pneg %p41
      %p48 = scmp.eq.s32.totalorder %s11, 1
      %p49 = por %p47, %p48
      %p50 = scmp.ne.s32.totalorder %s42, %s45
      %p51 = scmp.eq.s32.totalorder %s11, 0
      %p52 = por %p50, %p51
      %p53 = scmp.ne.s32.totalorder %s42, %s45
      %p54 = scmp.eq.s32.totalorder %s16, 1
      %p55 = por %p53, %p54
      %p56 = scmp.ne.s32.totalorder %s45, %s46
      %p57 = scmp.eq.s32.totalorder %s16, 0
      %p58 = por %p56, %p57
      %p59 = scmp.ne.s32.totalorder %s45, %s46
      %p60 = scmp.eq.s32.totalorder %s17, 1
      %p61 = por %p59, %p60
      %p63 = scmp.ne.s32.totalorder %s46, %s62
      %p64 = scmp.eq.s32.totalorder %s17, 0
      %p65 = por %p63, %p64
      %s67 = sadd.s32 %s66, 1
      %p70 = scmp.eq.s32.totalorder %s11, 1
      %p71 = scmp.ne.s32.totalorder %s66, %s68
      %p72 = scmp.eq.s32.totalorder %s11, 0
      %p73 = por %p71, %p72
      %p74 = scmp.ne.s32.totalorder %s66, %s68
      %p75 = scmp.eq.s32.totalorder %s16, 1
      %p76 = por %p74, %p75
      %p77 = scmp.ne.s32.totalorder %s68, %s69
      %p78 = scmp.eq.s32.totalorder %s16, 0
      %p79 = por %p77, %p78
      %p80 = scmp.ne.s32.totalorder %s68, %s69
      %p81 = scmp.eq.s32.totalorder %s17, 1
      %p82 = por %p80, %p81
      %p84 = scmp.ne.s32.totalorder %s69, %s83
      %p85 = scmp.eq.s32.totalorder %s17, 0
      %p86 = por %p84, %p85
      %s88 = sadd.s32 %s87, 1
      %p91 = scmp.eq.s32.totalorder %s11, 1
      %p92 = scmp.ne.s32.totalorder %s87, %s89
      %p93 = scmp.eq.s32.totalorder %s11, 0
      %p94 = por %p92, %p93
      %p95 = scmp.ne.s32.totalorder %s87, %s89
      %p96 = scmp.eq.s32.totalorder %s16, 1
      %p97 = por %p95, %p96
      %p98 = scmp.ne.s32.totalorder %s89, %s90
      %p99 = scmp.eq.s32.totalorder %s16, 0
      %p100 = por %p98, %p99
      %p101 = scmp.ne.s32.totalorder %s89, %s90
      %p102 = scmp.eq.s32.totalorder %s17, 1
      %p103 = por %p101, %p102
      %p105 = scmp.ne.s32.totalorder %s90, %s104
      %p106 = scmp.eq.s32.totalorder %s17, 0
      %p107 = por %p105, %p106
      %s108 = ssub.s32 %s11, %s18
      %p109 = scmp.eq.s32.totalorder %s108, 0
      %s111 = sadd.s32 %s110, 1
      %s112 = scalar_select %p109, %s110, %s111
      %p115 = pneg %p109
      %p116 = scmp.eq.s32.totalorder %s11, 1
      %p117 = por %p115, %p116
      %p118 = scmp.ne.s32.totalorder %s110, %s113
      %p119 = scmp.eq.s32.totalorder %s11, 0
      %p120 = por %p118, %p119
      %p121 = scmp.ne.s32.totalorder %s110, %s113
      %p122 = scmp.eq.s32.totalorder %s16, 1
      %p123 = por %p121, %p122
      %p124 = scmp.ne.s32.totalorder %s113, %s114
      %p125 = scmp.eq.s32.totalorder %s16, 0
      %p126 = por %p124, %p125
      %p127 = scmp.ne.s32.totalorder %s113, %s114
      %p128 = scmp.eq.s32.totalorder %s17, 1
      %p129 = por %p127, %p128
      %p131 = scmp.ne.s32.totalorder %s114, %s130
      %p132 = scmp.eq.s32.totalorder %s17, 0
      %p133 = por %p131, %p132
      %p134 = scmp.le.s32.totalorder 1, %s11
      %p135 = scmp.lt.s32.totalorder %s11, 3
      %p136 = pnand %p134, %p135
      %p137 = pneg %p136
      // Predicated region
      $region9: #{qskip_connection_forward.3} parent=5 // pred_check
        _
      $region10: #{qskip_connection_forward.3} parent=5 // pred_check_branch
        %139 = sbr.rel (%p136) target = $region12
      $region11: #{qskip_connection_forward.3} parent=5 // pred_region
        %s140 = ssub.s32 %s11, 1
        // Predicated region
        $region13: #{qskip_connection_forward.3} parent=11 // pred_check
          %p141 = pneg %p32
        $region14: #{qskip_connection_forward.3} parent=11 // pred_check_branch
          %143 = sbr.rel (%p141) target = $region16
        $region15: #{qskip_connection_forward.3} parent=11 // pred_region
          %s145 = ssub.s32 16, 16
          %146 = vsyncadd [#allocation3], %s145
          %s148 = sshll.u32 %s0, 4
          %s149 = int_to_ptr.vmem [resolvable:$true] %s148
          %151 = dma.vmem_to_smem %s149, 16, [#allocation2], [#allocation3]
        $region16: #{qskip_connection_forward.3} parent=11 // pred_fallthru
          _
        // Predicated region
        $region17: #{qskip_connection_forward.3} parent=11 // pred_check
          %p152 = pneg %p79
        $region18: #{qskip_connection_forward.3} parent=11 // pred_check_branch
          %154 = sbr.rel (%p152) target = $region20
        $region19: #{qskip_connection_forward.3} parent=11 // pred_region
          _
        $region20: #{qskip_connection_forward.3} parent=11 // pred_fallthru
          _
        // Predicated region
        $region21: #{qskip_connection_forward.3} parent=11 // pred_check
          %p155 = pneg %p100
        $region22: #{qskip_connection_forward.3} parent=11 // pred_check_branch
          %157 = sbr.rel (%p155) target = $region24
        $region23: #{qskip_connection_forward.3} parent=11 // pred_region
          _
        $region24: #{qskip_connection_forward.3} parent=11 // pred_fallthru
          _
      $region12: #{qskip_connection_forward.3} parent=5 // pred_fallthru
        _
      %p158 = scmp.lt.s32.totalorder %s11, 2
      // Predicated region
      $region25: #{qskip_connection_forward.3} parent=5 // pred_check
        %p159 = pneg %p158
      $region26: #{qskip_connection_forward.3} parent=5 // pred_check_branch
        %161 = sbr.rel (%p159) target = $region28
      $region27: #{qskip_connection_forward.3} parent=5 // pred_region
        // Predicated region
        $region29: #{qskip_connection_forward.3} parent=27 // pred_check
          %p162 = pneg %p52
        $region30: #{qskip_connection_forward.3} parent=27 // pred_check_branch
          %164 = sbr.rel (%p162) target = $region32
        $region31: #{qskip_connection_forward.3} parent=27 // pred_region
          %p165 = scmp.lt.s32.totalorder %s11, 1
          %s166 = scalar_select %p165, %s11, 1
          %s167 = smul.addr %s166, 6
          %s168 = smul.addr %s167, 2
          %s169 = scalar_lea.vmem %s1, %s168
        $region32: #{qskip_connection_forward.3} parent=27 // pred_fallthru
          _
      $region28: #{qskip_connection_forward.3} parent=5 // pred_fallthru
        _
      %p170 = scmp.le.s32.totalorder 1, %s11
      %p171 = scmp.lt.s32.totalorder %s11, 3
      %p172 = pnand %p170, %p171
      %p173 = pneg %p172
      // Predicated region
      $region33: #{qskip_connection_forward.3} parent=5 // pred_check
        _
      $region34: #{qskip_connection_forward.3} parent=5 // pred_check_branch
        %175 = sbr.rel (%p172) target = $region36
      $region35: #{qskip_connection_forward.3} parent=5 // pred_region
        %s176 = ssub.s32 %s11, 1
        // Predicated region
        $region37: #{qskip_connection_forward.3} parent=35 // pred_check
          %p177 = pneg %p32
        $region38: #{qskip_connection_forward.3} parent=35 // pred_check_branch
          %179 = sbr.rel (%p177) target = $region40
        $region39: #{qskip_connection_forward.3} parent=35 // pred_region
          %180 = dma.done [#allocation3], 16
        $region40: #{qskip_connection_forward.3} parent=35 // pred_fallthru
          _
        %181 = sfence
        %p182 = pneg %p32
        %p183 = pneg %p29
        %p184 = scmp.lt.s32.totalorder %s16, 1
        %s185 = scalar_select %p184, %s16, 1
        %s186 = smul.addr %s185, 6
        %s187 = smul.addr %s186, 2
        %s188 = scalar_lea.vmem %s1, %s187
        %p189 = pneg %p58
        %p190 = pneg %p55
        %p191 = pneg %p79
        %p192 = pneg %p76
        %p193 = pneg %p100
        %p194 = pneg %p97
        %p195 = pneg %p126
        %p196 = pneg %p123
        %p197 = scmp.lt.s32.totalorder %s16, 1
        %s198 = scalar_select %p197, %s16, 1
        %s199 = smul.addr %s198, 2
        %s200 = smul.addr %s199, 2
        %s201 = scalar_lea.vmem %s4, %s200
        %p202 = scmp.lt.s32.totalorder %s16, 1
        %s203 = scalar_select %p202, %s16, 1
        %s204 = smul.addr %s203, 6
        %s205 = smul.addr %s204, 2
        %s206 = scalar_lea.vmem %s1, %s205
        %p207 = scmp.lt.s32.totalorder %s16, 1
        %s208 = scalar_select %p207, %s16, 1
        %s209 = smul.addr %s208, 2
        %s210 = smul.addr %s209, 2
        %s211 = scalar_lea.vmem %s4, %s210
        %s213 = sld [smem:[#allocation2]]
        %s214 = sld [smem:[#allocation2 + $0x1]]
        %v215 = vld [vmem:[%s206] sm:$0xf]
        %v216 = vld [vmem:[%s206 + $0x4] sm:$0xf]
        %v217 = vld [vmem:[%s206 + $0x8] sm:$0x5]
        %v218 = vunpack.c.l.s8.bf16 %v215
        %v219 = vunpack.c.l.s8.bf16 %v216
        %v220 = vunpack.c.l.s8.bf16 %v217
        %v221 = vld [vmem:[%s2] sm:$0xf]
        %v222 = vld [vmem:[%s2 + $0x4] sm:$0xf]
        %v223 = vld [vmem:[%s2 + $0x8] sm:$0xf]
        %v224 = vld [vmem:[%s2 + $0xc] sm:$0xf]
        %v225 = vld [vmem:[%s2 + $0x10] sm:$0xf]
        %v226 = vld [vmem:[%s2 + $0x14] sm:$0xf]
        %v227 = vld [vmem:[%s2 + $0x18] sm:$0xf]
        %v228 = vld [vmem:[%s2 + $0x1c] sm:$0xf]
        %v229 = vld [vmem:[%s2 + $0x20] sm:$0xf]
        %v230 = vld [vmem:[%s2 + $0x24] sm:$0xf]
        %v231 = vld [vmem:[%s2 + $0x28] sm:$0xf]
        %v232 = vld [vmem:[%s2 + $0x2c] sm:$0xf]
        %v233 = vld [vmem:[%s2 + $0x30] sm:$0xf]
        %v234 = vld [vmem:[%s2 + $0x34] sm:$0xf]
        %v235 = vld [vmem:[%s2 + $0x38] sm:$0xf]
        %v236 = vld [vmem:[%s2 + $0x3c] sm:$0xf]
        %v237 = vld [vmem:[%s2 + $0x40] sm:$0xf]
        %v238 = vld [vmem:[%s2 + $0x44] sm:$0xf]
        %s239 = scalar_lea.vmem %s2, 72
        %v240 = vld [vmem:[%s239] sm:$0xf]
        %v241 = vld [vmem:[%s239 + $0x4] sm:$0xf]
        %v242 = vld [vmem:[%s239 + $0x8] sm:$0xf]
        %v243 = vld [vmem:[%s239 + $0xc] sm:$0xf]
        %v244 = vld [vmem:[%s239 + $0x10] sm:$0xf]
        %v245 = vld [vmem:[%s239 + $0x14] sm:$0xf]
        %v246 = vld [vmem:[%s239 + $0x18] sm:$0xf]
        %v247 = vld [vmem:[%s239 + $0x1c] sm:$0xf]
        %v248 = vld [vmem:[%s239 + $0x20] sm:$0xf]
        %v249 = vld [vmem:[%s239 + $0x24] sm:$0xf]
        %v250 = vld [vmem:[%s239 + $0x28] sm:$0xf]
        %v251 = vld [vmem:[%s239 + $0x2c] sm:$0xf]
        %v252 = vld [vmem:[%s239 + $0x30] sm:$0xf]
        %v253 = vld [vmem:[%s239 + $0x34] sm:$0xf]
        %v254 = vld [vmem:[%s239 + $0x38] sm:$0xf]
        %v255 = vld [vmem:[%s239 + $0x3c] sm:$0xf]
        %v256 = vld [vmem:[%s239 + $0x40] sm:$0xf]
        %v257 = vld [vmem:[%s239 + $0x44] sm:$0xf]
        %v261 = vunpack.c.l.b16 %v218
        %v262 = vunpack.c.h.b16 %v218
        %v263 = vunpack.c.l.b16 %v219
        %v264 = vunpack.c.h.b16 %v219
        %v265 = vunpack.c.l.b16 %v220
        %v266 = vunpack.c.h.b16 %v220
        %v267 = vpack.c.b16 %v263, %v261
        %v268 = vpack.c.b16 %v264, %v262
        %v269 = vpack.c.b16 %v265, %v265
        %v270 = vpack.c.b16 %v266, %v266
        %vm271 = vsmask.f32 7424
        %v273 = vshrl.u32 %v267, 16
        %v275 = vshll.u32 %v267, 16
        %v277 = vrot.slane %v275, 1
        %v278 = vor.u32 %v273, %v277
        %v280 = vshll.u32 %v269, 16
        %v282 = vrot.slane %v280, 1
        %v283 = vsel %vm271, %v278, %v282
        %v285 = vshrl.u32 %v268, 16
        %v287 = vshll.u32 %v268, 16
        %v289 = vrot.slane %v287, 1
        %v290 = vor.u32 %v285, %v289
        %v292 = vshll.u32 %v270, 16
        %v294 = vrot.slane %v292, 1
        %v295 = vsel %vm271, %v290, %v294
        %v315 = vunpack.c.l.b16 %v240
        %v316 = vunpack.c.l.b16 %v241
        %v317 = vunpack.c.l.b16 %v242
        %v318 = vunpack.c.l.b16 %v243
        %v319 = vunpack.c.l.b16 %v244
        %v320 = vunpack.c.l.b16 %v245
        %v321 = vunpack.c.l.b16 %v246
        %v322 = vunpack.c.l.b16 %v247
        %v323 = vunpack.c.l.b16 %v248
        %v324 = vunpack.c.l.b16 %v249
        %v325 = vunpack.c.l.b16 %v250
        %v326 = vunpack.c.l.b16 %v251
        %v327 = vunpack.c.l.b16 %v252
        %v328 = vunpack.c.l.b16 %v253
        %v329 = vunpack.c.l.b16 %v254
        %v330 = vunpack.c.l.b16 %v255
        %v331 = vunpack.c.l.b16 %v256
        %v332 = vunpack.c.l.b16 %v257
        %v333 = vpack.c.b16 %v316, %v315
        %v334 = vpack.c.b16 %v318, %v317
        %v335 = vpack.c.b16 %v320, %v319
        %v336 = vpack.c.b16 %v322, %v321
        %v337 = vpack.c.b16 %v324, %v323
        %v338 = vpack.c.b16 %v326, %v325
        %v339 = vpack.c.b16 %v328, %v327
        %v340 = vpack.c.b16 %v330, %v329
        %v341 = vpack.c.b16 %v332, %v331
        %vm351 = vcmask 130048
        %v353 = vsel %vm351, %v295, 0
        %355 = vmatprep.subr.bf16.mxu0 0
        %356 = vmatpush1.bf16.msra.mxu0 %v333
        %357 = vmatprep.subr.bf16.mxu0 0
        %358 = vmatpush1.bf16.msra.mxu0 %v334
        %359 = vmatprep.subr.bf16.mxu0 0
        %360 = vmatpush1.bf16.msra.mxu0 %v335
        %361 = vmatprep.subr.bf16.mxu0 0
        %362 = vmatpush1.bf16.msra.mxu0 %v336
        %363 = vmatprep.subr.bf16.mxu0 0
        %364 = vmatpush1.bf16.msra.mxu0 %v337
        %365 = vmatprep.subr.bf16.mxu0 0
        %366 = vmatpush1.bf16.msra.mxu0 %v338
        %367 = vmatprep.subr.bf16.mxu0 0
        %368 = vmatpush1.bf16.msra.mxu0 %v339
        %369 = vmatprep.subr.bf16.mxu0 0
        %370 = vmatpush1.bf16.msra.mxu0 %v340
        %371 = vmatprep.subr.bf16.mxu0 0
        %372 = vmatpush1.bf16.msra.mxu0 %v341
        %373 = vmatprep.subr.bf16.mxu0 0
        %374 = vmatpush1.bf16.msra.mxu0 0
        %375 = vmatprep.subr.bf16.mxu0 0
        %376 = vmatpush1.bf16.msra.mxu0 0
        %377 = vmatprep.subr.bf16.mxu0 0
        %378 = vmatpush1.bf16.msra.mxu0 0
        %379 = vmatprep.subr.bf16.mxu0 0
        %380 = vmatpush1.bf16.msra.mxu0 0
        %381 = vmatprep.subr.bf16.mxu0 0
        %382 = vmatpush1.bf16.msra.mxu0 0
        %383 = vmatprep.subr.bf16.mxu0 0
        %384 = vmatpush1.bf16.msra.mxu0 0
        %385 = vmatprep.subr.bf16.mxu0 0
        %386 = vmatpush1.bf16.msra.mxu0 0
        %387 = vmatprep.mubr.bf16.mxu0 %v353
        %388 = vmatmul.mubr.bf16.gmra.mrb[0].mxu0 %v283
        %v389 = vpop.f32.mrb[0].mxu0
        %v390 = vadd.f32 0.0, %v389
        %v391 = vpop.f32.mrb[0].mxu0
        %v392 = vpop.f32.mrb[0].mxu0
        %v393 = vadd.f32 0.0, %v392
        %v394 = vpop.f32.mrb[0].mxu0
        %395 = vdwg.mxu0
        %v415 = vunpack.c.l.b16 %v221
        %v416 = vunpack.c.l.b16 %v222
        %v417 = vunpack.c.l.b16 %v223
        %v418 = vunpack.c.l.b16 %v224
        %v419 = vunpack.c.l.b16 %v225
        %v420 = vunpack.c.l.b16 %v226
        %v421 = vunpack.c.l.b16 %v227
        %v422 = vunpack.c.l.b16 %v228
        %v423 = vunpack.c.l.b16 %v229
        %v424 = vunpack.c.l.b16 %v230
        %v425 = vunpack.c.l.b16 %v231
        %v426 = vunpack.c.l.b16 %v232
        %v427 = vunpack.c.l.b16 %v233
        %v428 = vunpack.c.l.b16 %v234
        %v429 = vunpack.c.l.b16 %v235
        %v430 = vunpack.c.l.b16 %v236
        %v431 = vunpack.c.l.b16 %v237
        %v432 = vunpack.c.l.b16 %v238
        %v433 = vpack.c.b16 %v416, %v415
        %v434 = vpack.c.b16 %v418, %v417
        %v435 = vpack.c.b16 %v420, %v419
        %v436 = vpack.c.b16 %v422, %v421
        %v437 = vpack.c.b16 %v424, %v423
        %v438 = vpack.c.b16 %v426, %v425
        %v439 = vpack.c.b16 %v428, %v427
        %v440 = vpack.c.b16 %v430, %v429
        %v441 = vpack.c.b16 %v432, %v431
        %v451 = vsel %vm351, %v268, 0
        %453 = vmatprep.subr.bf16.mxu0 0
        %454 = vmatpush1.bf16.msra.mxu0 %v433
        %455 = vmatprep.subr.bf16.mxu0 0
        %456 = vmatpush1.bf16.msra.mxu0 %v434
        %457 = vmatprep.subr.bf16.mxu0 0
        %458 = vmatpush1.bf16.msra.mxu0 %v435
        %459 = vmatprep.subr.bf16.mxu0 0
        %460 = vmatpush1.bf16.msra.mxu0 %v436
        %461 = vmatprep.subr.bf16.mxu0 0
        %462 = vmatpush1.bf16.msra.mxu0 %v437
        %463 = vmatprep.subr.bf16.mxu0 0
        %464 = vmatpush1.bf16.msra.mxu0 %v438
        %465 = vmatprep.subr.bf16.mxu0 0
        %466 = vmatpush1.bf16.msra.mxu0 %v439
        %467 = vmatprep.subr.bf16.mxu0 0
        %468 = vmatpush1.bf16.msra.mxu0 %v440
        %469 = vmatprep.subr.bf16.mxu0 0
        %470 = vmatpush1.bf16.msra.mxu0 %v441
        %471 = vmatprep.subr.bf16.mxu0 0
        %472 = vmatpush1.bf16.msra.mxu0 0
        %473 = vmatprep.subr.bf16.mxu0 0
        %474 = vmatpush1.bf16.msra.mxu0 0
        %475 = vmatprep.subr.bf16.mxu0 0
        %476 = vmatpush1.bf16.msra.mxu0 0
        %477 = vmatprep.subr.bf16.mxu0 0
        %478 = vmatpush1.bf16.msra.mxu0 0
        %479 = vmatprep.subr.bf16.mxu0 0
        %480 = vmatpush1.bf16.msra.mxu0 0
        %481 = vmatprep.subr.bf16.mxu0 0
        %482 = vmatpush1.bf16.msra.mxu0 0
        %483 = vmatprep.subr.bf16.mxu0 0
        %484 = vmatpush1.bf16.msra.mxu0 0
        %485 = vmatprep.mubr.bf16.mxu0 %v451
        %486 = vmatmul.mubr.bf16.gmra.mrb[0].mxu0 %v267
        %v487 = vpop.f32.mrb[0].mxu0
        %v488 = vadd.f32 %v390, %v487
        %v489 = vpop.f32.mrb[0].mxu0
        %v490 = vpop.f32.mrb[0].mxu0
        %v491 = vadd.f32 %v393, %v490
        %v492 = vpop.f32.mrb[0].mxu0
        %493 = vdwg.mxu0
        %s494 = scalar_lea.vmem %s2, 144
        %v495 = vld [vmem:[%s494] sm:$0xf]
        %v496 = vld [vmem:[%s494 + $0x4] sm:$0xf]
        %v497 = vld [vmem:[%s494 + $0x8] sm:$0xf]
        %v498 = vld [vmem:[%s494 + $0xc] sm:$0xf]
        %v499 = vld [vmem:[%s494 + $0x10] sm:$0xf]
        %v500 = vld [vmem:[%s494 + $0x14] sm:$0xf]
        %v501 = vld [vmem:[%s494 + $0x18] sm:$0xf]
        %v502 = vld [vmem:[%s494 + $0x1c] sm:$0xf]
        %v503 = vld [vmem:[%s494 + $0x20] sm:$0xf]
        %v504 = vld [vmem:[%s494 + $0x24] sm:$0xf]
        %v505 = vld [vmem:[%s494 + $0x28] sm:$0xf]
        %v506 = vld [vmem:[%s494 + $0x2c] sm:$0xf]
        %v507 = vld [vmem:[%s494 + $0x30] sm:$0xf]
        %v508 = vld [vmem:[%s494 + $0x34] sm:$0xf]
        %v509 = vld [vmem:[%s494 + $0x38] sm:$0xf]
        %v510 = vld [vmem:[%s494 + $0x3c] sm:$0xf]
        %v511 = vld [vmem:[%s494 + $0x40] sm:$0xf]
        %v512 = vld [vmem:[%s494 + $0x44] sm:$0xf]
        %vm513 = vcmask 1046528
        %v514 = vrot.slane %v267, 1
        %v515 = vrot.slane %v269, 1
        %v516 = vsel %vm513, %v514, %v515
        %v517 = vrot.slane %v268, 1
        %v518 = vrot.slane %v270, 1
        %v519 = vsel %vm513, %v517, %v518
        %v539 = vunpack.c.l.b16 %v495
        %v540 = vunpack.c.l.b16 %v496
        %v541 = vunpack.c.l.b16 %v497
        %v542 = vunpack.c.l.b16 %v498
        %v543 = vunpack.c.l.b16 %v499
        %v544 = vunpack.c.l.b16 %v500
        %v545 = vunpack.c.l.b16 %v501
        %v546 = vunpack.c.l.b16 %v502
        %v547 = vunpack.c.l.b16 %v503
        %v548 = vunpack.c.l.b16 %v504
        %v549 = vunpack.c.l.b16 %v505
        %v550 = vunpack.c.l.b16 %v506
        %v551 = vunpack.c.l.b16 %v507
        %v552 = vunpack.c.l.b16 %v508
        %v553 = vunpack.c.l.b16 %v509
        %v554 = vunpack.c.l.b16 %v510
        %v555 = vunpack.c.l.b16 %v511
        %v556 = vunpack.c.l.b16 %v512
        %v557 = vpack.c.b16 %v540, %v539
        %v558 = vpack.c.b16 %v542, %v541
        %v559 = vpack.c.b16 %v544, %v543
        %v560 = vpack.c.b16 %v546, %v545
        %v561 = vpack.c.b16 %v548, %v547
        %v562 = vpack.c.b16 %v550, %v549
        %v563 = vpack.c.b16 %v552, %v551
        %v564 = vpack.c.b16 %v554, %v553
        %v565 = vpack.c.b16 %v556, %v555
        %v576 = vsel %vm351, %v519, 0
        %578 = vmatprep.subr.bf16.mxu0 0
        %579 = vmatpush1.bf16.msra.mxu0 %v557
        %580 = vmatprep.subr.bf16.mxu0 0
        %581 = vmatpush1.bf16.msra.mxu0 %v558
        %582 = vmatprep.subr.bf16.mxu0 0
        %583 = vmatpush1.bf16.msra.mxu0 %v559
        %584 = vmatprep.subr.bf16.mxu0 0
        %585 = vmatpush1.bf16.msra.mxu0 %v560
        %586 = vmatprep.subr.bf16.mxu0 0
        %587 = vmatpush1.bf16.msra.mxu0 %v561
        %588 = vmatprep.subr.bf16.mxu0 0
        %589 = vmatpush1.bf16.msra.mxu0 %v562
        %590 = vmatprep.subr.bf16.mxu0 0
        %591 = vmatpush1.bf16.msra.mxu0 %v563
        %592 = vmatprep.subr.bf16.mxu0 0
        %593 = vmatpush1.bf16.msra.mxu0 %v564
        %594 = vmatprep.subr.bf16.mxu0 0
        %595 = vmatpush1.bf16.msra.mxu0 %v565
        %596 = vmatprep.subr.bf16.mxu0 0
        %597 = vmatpush1.bf16.msra.mxu0 0
        %598 = vmatprep.subr.bf16.mxu0 0
        %599 = vmatpush1.bf16.msra.mxu0 0
        %600 = vmatprep.subr.bf16.mxu0 0
        %601 = vmatpush1.bf16.msra.mxu0 0
        %602 = vmatprep.subr.bf16.mxu0 0
        %603 = vmatpush1.bf16.msra.mxu0 0
        %604 = vmatprep.subr.bf16.mxu0 0
        %605 = vmatpush1.bf16.msra.mxu0 0
        %606 = vmatprep.subr.bf16.mxu0 0
        %607 = vmatpush1.bf16.msra.mxu0 0
        %608 = vmatprep.subr.bf16.mxu0 0
        %609 = vmatpush1.bf16.msra.mxu0 0
        %610 = vmatprep.mubr.bf16.mxu0 %v576
        %611 = vmatmul.mubr.bf16.gmra.mrb[0].mxu0 %v516
        %v612 = vpop.f32.mrb[0].mxu0
        %v613 = vadd.f32 0.0, %v612
        %v614 = vpop.f32.mrb[0].mxu0
        %v615 = vpop.f32.mrb[0].mxu0
        %v616 = vadd.f32 0.0, %v615
        %v617 = vpop.f32.mrb[0].mxu0
        %618 = vdwg.mxu0
        %v619 = vadd.f32 %v488, %v613
        %v620 = vadd.f32 %v491, %v616
        %v621 = vld [vmem:[%s3] sm:$0x1]
        %v623 = vlaneseq
        %v624 = vshrl.u32 %v623, 7
        %v625 = vsub.s32 0, %v624
        %v626 = vrot.slane %v621, %v625
        %v628 = vadd.f32 %v619, %v626
        %v629 = vadd.f32 %v620, %v626
        %v630 = vround.ne.pseudo %v628
        %v631 = vround.ne.pseudo %v629
        %v632 = vstv %s213
        %v633 = vmax.f32 %v632, %v630
        %v634 = vmax.f32 %v632, %v631
        %v635 = vstv %s214
        %v636 = vmin.f32 %v635, %v633
        %v637 = vmin.f32 %v635, %v634
        %v638 = vtrunc.f32 %v636
        %v639 = vtrunc.f32 %v637
        %v640 = vpack.c.f32.eXmY %v638, %v639, 312
        %v644 = vpack.c.b8 %v640, %v640
        %v646 = vunpack.c.0.s8 %v644
        %v647 = vunpack.c.1.s8 %v644
        %v648 = vpack.c.b16 %v646, %v646
        %v649 = vpack.c.b8 %v648, %v648
        %v650 = vpack.c.b16 %v647, %v647
        %v651 = vpack.c.b8 %v650, %v650
        %652 = vst [vmem:[%s211] sm:$0x3] %v649
        %653 = vst [vmem:[%s211 + $0x2] sm:$0x3] %v651
        %p654 = scmp.lt.s32.totalorder %s16, 1
        %s655 = scalar_select %p654, %s16, 1
        %s656 = smul.addr %s655, 2
        %s657 = smul.addr %s656, 2
        %s658 = scalar_lea.vmem %s4, %s657
        // Predicated region
        $region41: #{qskip_connection_forward.3} parent=35 // pred_check
          %p659 = pneg %p123
        $region42: #{qskip_connection_forward.3} parent=35 // pred_check_branch
          %661 = sbr.rel (%p659) target = $region44
        $region43: #{qskip_connection_forward.3} parent=35 // pred_region
          _
        $region44: #{qskip_connection_forward.3} parent=35 // pred_fallthru
          _
      $region36: #{qskip_connection_forward.3} parent=5 // pred_fallthru
        _
      %p662 = scmp.le.s32.totalorder 2, %s11
      // Predicated region
      $region45: #{qskip_connection_forward.3} parent=5 // pred_check
        %p663 = pneg %p662
      $region46: #{qskip_connection_forward.3} parent=5 // pred_check_branch
        %665 = sbr.rel (%p663) target = $region48
      $region47: #{qskip_connection_forward.3} parent=5 // pred_region
        %s666 = ssub.s32 %s11, 2
        // Predicated region
        $region49: #{qskip_connection_forward.3} parent=47 // pred_check
          %p667 = pneg %p129
        $region50: #{qskip_connection_forward.3} parent=47 // pred_check_branch
          %669 = sbr.rel (%p667) target = $region52
        $region51: #{qskip_connection_forward.3} parent=47 // pred_region
          %p670 = scmp.lt.s32.totalorder %s17, 1
          %s671 = scalar_select %p670, %s17, 1
          %s672 = smul.addr %s671, 2
          %s673 = smul.addr %s672, 2
          %s674 = scalar_lea.vmem %s4, %s673
        $region52: #{qskip_connection_forward.3} parent=47 // pred_fallthru
          _
      $region48: #{qskip_connection_forward.3} parent=5 // pred_fallthru
        _
    $region6: #{qskip_connection_forward.3} parent=1 // loop_footer
      %s15 = sadd.s32 1, %s11
    $region7: #{qskip_connection_forward.3} parent=1 // loop_footer_branch
      %10 = sbr.rel target = $region3
    $region8: #{qskip_connection_forward.3} parent=1 // loop_exit
      _
    %675 = vsyncpa [#allocation3], 1
    %s676 = scalar_lea.sflag [#allocation3], 1
    %677 = vsyncpa %s676, 1

// kernel: qskip_connection_forward.5
$region0: #{qskip_connection_forward.5}
  #allocation0 [shape = 'u32[]', space=smem, size = 0x4, offset = 0x4, fixed_abs, tag = 'smem constant byte address 0x4 - core index']
  #allocation1 [shape = 'u32[144,128]{1,0:T(1,128)}', space=vmem, size = 0x12000, scoped, tag = 'internal scratch']
  %s0 = inlined_call_operand.vmem [shape: f32[6], index: 0, kind: input, shape index: {}]
  %s1 = inlined_call_operand.vmem [shape: s8[32,128], index: 1, kind: input, shape index: {}]
  %s2 = inlined_call_operand.vmem [shape: s8[32,128], index: 2, kind: input, shape index: {}]
  %s3 = inlined_call_operand.vmem [shape: s8[32,128], index: 3, kind: output, shape index: {}]
  %s4 = sld [smem:[#allocation0]]
  $region26: #{qskip_connection_forward.5} parent=0
    _
  %s6 = ssub.s32 1, %s4
  %s7 = scalar_select 0, %s6, %s4
  $region1: #{qskip_connection_forward.5} parent=0
    #allocation2 [shape = 'u8[512]{0}', space=smem, size = 0x200, scoped, tag = 'input window, operand 0, single buffered']
    #allocation3 [shape = 's32[1]{0}', space=sflag, size = 0x4, scoped, tag = 'scoped memory for qskip_connection_forward.5']
    %8 = vsyncpa [#allocation3], 0
    // Predicated region
    $region2: #{qskip_connection_forward.5} parent=1 // pred_check
      _
    $region3: #{qskip_connection_forward.5} parent=1 // pred_check_branch
      %10 = sbr.rel (0) target = $region5
    $region4: #{qskip_connection_forward.5} parent=1 // pred_region
      %s12 = ssub.s32 16, 16
      %13 = vsyncadd [#allocation3], %s12
      %s15 = sshll.u32 %s0, 4
      %s16 = int_to_ptr.vmem [resolvable:$true] %s15
      %18 = dma.vmem_to_smem %s16, 16, [#allocation2], [#allocation3]
    $region5: #{qskip_connection_forward.5} parent=1 // pred_fallthru
      _
    // Predicated region
    $region6: #{qskip_connection_forward.5} parent=1 // pred_check
      _
    $region7: #{qskip_connection_forward.5} parent=1 // pred_check_branch
      %20 = sbr.rel (0) target = $region9
    $region8: #{qskip_connection_forward.5} parent=1 // pred_region
      _
    $region9: #{qskip_connection_forward.5} parent=1 // pred_fallthru
      _
    // Predicated region
    $region10: #{qskip_connection_forward.5} parent=1 // pred_check
      _
    $region11: #{qskip_connection_forward.5} parent=1 // pred_check_branch
      %22 = sbr.rel (0) target = $region13
    $region12: #{qskip_connection_forward.5} parent=1 // pred_region
      _
    $region13: #{qskip_connection_forward.5} parent=1 // pred_fallthru
      _
    // Predicated region
    $region14: #{qskip_connection_forward.5} parent=1 // pred_check
      _
    $region15: #{qskip_connection_forward.5} parent=1 // pred_check_branch
      %24 = sbr.rel (0) target = $region17
    $region16: #{qskip_connection_forward.5} parent=1 // pred_region
      %25 = dma.done [#allocation3], 16
    $region17: #{qskip_connection_forward.5} parent=1 // pred_fallthru
      _
    %26 = sfence
    %v27 = vld [vmem:[%s1] sm:$0xff]
    %v28 = vunpack.c.0.s8 %v27
    %v29 = vunpack.c.1.s8 %v27
    %v30 = vunpack.c.2.s8 %v27
    %v31 = vunpack.c.3.s8 %v27
    %v32 = vcvt.s32.f32 %v28
    %v33 = vcvt.s32.f32 %v29
    %v34 = vcvt.s32.f32 %v30
    %v35 = vcvt.s32.f32 %v31
    %s36 = sld [smem:[#allocation2]]
    %v37 = vstv %s36
    %v38 = vmul.f32 %v32, %v37
    %v39 = vmul.f32 %v33, %v37
    %v40 = vmul.f32 %v34, %v37
    %v41 = vmul.f32 %v35, %v37
    %s42 = sld [smem:[#allocation2 + $0x1]]
    %v43 = vstv %s42
    %v44 = vadd.f32 %v38, %v43
    %v45 = vadd.f32 %v39, %v43
    %v46 = vadd.f32 %v40, %v43
    %v47 = vadd.f32 %v41, %v43
    %v48 = vld [vmem:[%s2] sm:$0x3]
    %v49 = vld [vmem:[%s2 + $0x2] sm:$0x3]
    %v50 = vld [vmem:[%s2 + $0x4] sm:$0x3]
    %v51 = vld [vmem:[%s2 + $0x6] sm:$0x3]
    %v52 = vunpack.c.0.s8 %v48
    %v53 = vunpack.c.0.s8 %v49
    %v54 = vunpack.c.0.s8 %v50
    %v55 = vunpack.c.0.s8 %v51
    %v56 = vcvt.s32.f32 %v52
    %v57 = vcvt.s32.f32 %v53
    %v58 = vcvt.s32.f32 %v54
    %v59 = vcvt.s32.f32 %v55
    %s60 = sld [smem:[#allocation2 + $0x2]]
    %v61 = vstv %s60
    %v62 = vmul.f32 %v56, %v61
    %v63 = vmul.f32 %v57, %v61
    %v64 = vmul.f32 %v58, %v61
    %v65 = vmul.f32 %v59, %v61
    %s66 = sld [smem:[#allocation2 + $0x3]]
    %v67 = vstv %s66
    %v68 = vadd.f32 %v62, %v67
    %v69 = vadd.f32 %v63, %v67
    %v70 = vadd.f32 %v64, %v67
    %v71 = vadd.f32 %v65, %v67
    %v72 = vadd.f32 %v44, %v68
    %v73 = vadd.f32 %v45, %v69
    %v74 = vadd.f32 %v46, %v70
    %v75 = vadd.f32 %v47, %v71
    %v76 = vmax.f32 %v72, 0.0
    %v77 = vmax.f32 %v73, 0.0
    %v78 = vmax.f32 %v74, 0.0
    %v79 = vmax.f32 %v75, 0.0
    %s80 = sld [smem:[#allocation2 + $0x4]]
    %v81 = vstv %s80
    %v82 = vmul.f32 %v76, %v81
    %v83 = vmul.f32 %v77, %v81
    %v84 = vmul.f32 %v78, %v81
    %v85 = vmul.f32 %v79, %v81
    %s86 = sld [smem:[#allocation2 + $0x5]]
    %v87 = vstv %s86
    %v88 = vadd.f32 %v82, %v87
    %v89 = vadd.f32 %v83, %v87
    %v90 = vadd.f32 %v84, %v87
    %v91 = vadd.f32 %v85, %v87
    %v92 = vround.ne.pseudo %v88
    %v93 = vround.ne.pseudo %v89
    %v94 = vround.ne.pseudo %v90
    %v95 = vround.ne.pseudo %v91
    %v96 = vmax.f32 %v92, -128.0
    %v97 = vmax.f32 %v93, -128.0
    %v98 = vmax.f32 %v94, -128.0
    %v99 = vmax.f32 %v95, -128.0
    %v100 = vmin.f32 %v96, 127.0
    %v101 = vmin.f32 %v97, 127.0
    %v102 = vmin.f32 %v98, 127.0
    %v103 = vmin.f32 %v99, 127.0
    %v104 = vtrunc.f32 %v100
    %v105 = vtrunc.f32 %v101
    %v106 = vtrunc.f32 %v102
    %v107 = vtrunc.f32 %v103
    %v108 = vpack.c.f32.eXmY %v104, %v105, 312
    %v112 = vpack.c.f32.eXmY %v106, %v107, 312
    %v116 = vpack.c.b8 %v112, %v108
    %v118 = vunpack.c.0.s8 %v116
    %v119 = vunpack.c.1.s8 %v116
    %v120 = vunpack.c.2.s8 %v116
    %v121 = vunpack.c.3.s8 %v116
    %v122 = vpack.c.b16 %v118, %v118
    %v123 = vpack.c.b8 %v122, %v122
    %v124 = vpack.c.b16 %v119, %v119
    %v125 = vpack.c.b8 %v124, %v124
    %v126 = vpack.c.b16 %v120, %v120
    %v127 = vpack.c.b8 %v126, %v126
    %v128 = vpack.c.b16 %v121, %v121
    %v129 = vpack.c.b8 %v128, %v128
    %130 = vst [vmem:[%s3] sm:$0x3] %v123
    %131 = vst [vmem:[%s3 + $0x2] sm:$0x3] %v125
    %132 = vst [vmem:[%s3 + $0x4] sm:$0x3] %v127
    %133 = vst [vmem:[%s3 + $0x6] sm:$0x3] %v129
    // Predicated region
    $region18: #{qskip_connection_forward.5} parent=1 // pred_check
      _
    $region19: #{qskip_connection_forward.5} parent=1 // pred_check_branch
      %135 = sbr.rel (0) target = $region21
    $region20: #{qskip_connection_forward.5} parent=1 // pred_region
      _
    $region21: #{qskip_connection_forward.5} parent=1 // pred_fallthru
      _
    // Predicated region
    $region22: #{qskip_connection_forward.5} parent=1 // pred_check
      _
    $region23: #{qskip_connection_forward.5} parent=1 // pred_check_branch
      %137 = sbr.rel (0) target = $region25
    $region24: #{qskip_connection_forward.5} parent=1 // pred_region
      _
    $region25: #{qskip_connection_forward.5} parent=1 // pred_fallthru
      _
    %138 = vsyncpa [#allocation3], 1

</llo_original>
